<compile_context>
chip_gen: v7x
topology: tpu7x:2x2x1
jax: 0.10.0
libtpu: 0.0.40
codegen_flags: <defaults>
</compile_context>

<pallas_src>
import math

import jax
import jax.numpy as jnp
from jax.experimental import pallas as pl
from jax.experimental.pallas import tpu as pltpu


# ---------------------------------------------------------------------------
# Tiled linear with K-reduction axis:  y = x @ wt + b   (wt already transposed)
# ---------------------------------------------------------------------------
def _linear_kernel(x_ref, wt_ref, b_ref, o_ref, acc_ref):
    kk = pl.program_id(2)

    @pl.when(kk == 0)
    def _():
        acc_ref[...] = jnp.zeros_like(acc_ref)

    acc_ref[...] += jnp.dot(x_ref[...], wt_ref[...],
                            preferred_element_type=jnp.float32)

    @pl.when(kk == pl.num_programs(2) - 1)
    def _():
        o_ref[...] = (acc_ref[...] + b_ref[...]).astype(o_ref.dtype)


def _linear(x, wt, b, *, out_dtype, block_m=256, block_n=512, block_k=512,
            vmem_limit_bytes=None):
    """x: (M, K), wt: (K, N), b: (1, N) float32  ->  (M, N) out_dtype."""
    M, K = x.shape
    K2, N = wt.shape
    assert K == K2, "x / weight contraction mismatch"
    bm = min(block_m, M)
    bn = min(block_n, N)
    # K-padding would pollute the accumulator; fall back to full-K if uneven.
    tk = block_k if (K % block_k == 0) else K
    grid = (pl.cdiv(M, bm), pl.cdiv(N, bn), K // tk)
    return pl.pallas_call(
        _linear_kernel,
        out_shape=jax.ShapeDtypeStruct((M, N), out_dtype),
        grid_spec=pltpu.PrefetchScalarGridSpec(
            num_scalar_prefetch=0,
            grid=grid,
            in_specs=[
                pl.BlockSpec((bm, tk), lambda i, j, kk: (i, kk)),
                pl.BlockSpec((tk, bn), lambda i, j, kk: (kk, j)),
                pl.BlockSpec((1, bn), lambda i, j, kk: (0, j)),
            ],
            out_specs=pl.BlockSpec((bm, bn), lambda i, j, kk: (i, j)),
            scratch_shapes=[pltpu.VMEM((bm, bn), jnp.float32)],
        ),
        compiler_params=pltpu.CompilerParams(
            dimension_semantics=("parallel", "parallel", "arbitrary"),
            vmem_limit_bytes=vmem_limit_bytes),
    )(x, wt, b)


# ---------------------------------------------------------------------------
# Flash-style attention over (B, H, S, depth), no mask (module's mask=None path)
# ---------------------------------------------------------------------------
def _flash_attn_kernel(q_ref, k_ref, v_ref, o_ref, m_sc, l_sc, acc_sc):
    kv = pl.program_id(3)

    @pl.when(kv == 0)
    def _():
        m_sc[...] = jnp.full(m_sc.shape, -jnp.inf, m_sc.dtype)
        l_sc[...] = jnp.zeros(l_sc.shape, l_sc.dtype)
        acc_sc[...] = jnp.zeros(acc_sc.shape, acc_sc.dtype)

    q = q_ref[...]                          # (bq, depth), scale folded into Wq
    k = k_ref[...]                          # (bk, depth)
    v = v_ref[...]                          # (bk, depth)

    # q @ k^T via dot_general (contract last dims) -- no explicit .T relayout.
    s = jax.lax.dot_general(q, k, (((1,), (1,)), ((), ())),
                            preferred_element_type=jnp.float32)  # (bq, bk) f32

    m_prev = m_sc[...]
    m_new = jnp.maximum(m_prev, jnp.max(s, axis=-1, keepdims=True))
    alpha = jnp.exp(m_prev - m_new)
    p = jnp.exp(s - m_new)                                        # f32 softmax
    l_sc[...] = alpha * l_sc[...] + jnp.sum(p, axis=-1, keepdims=True)
    acc_sc[...] = alpha * acc_sc[...] + jnp.dot(
        p.astype(v.dtype), v, preferred_element_type=jnp.float32)
    m_sc[...] = m_new

    @pl.when(kv == pl.num_programs(3) - 1)
    def _():
        inv_l = pl.reciprocal(l_sc[...], approx=False)            # exact
        o_ref[...] = (acc_sc[...] * inv_l).astype(o_ref.dtype)


def _flash_attention(q, k, v, *, out_dtype, block_q=128, block_kv=256,
                     vmem_limit_bytes=None):
    """q, k, v: (B, H, S, depth) -> context (B, H, S, depth)."""
    B, H, S, depth = q.shape
    bq = min(block_q, S)
    bk = min(block_kv, S)
    assert S % bq == 0, "seq_len must be divisible by block_q"
    assert S % bk == 0, "seq_len must be divisible by block_kv"
    grid = (B, H, S // bq, S // bk)

    return pl.pallas_call(
        _flash_attn_kernel,
        out_shape=jax.ShapeDtypeStruct((B, H, S, depth), out_dtype),
        grid_spec=pltpu.PrefetchScalarGridSpec(
            num_scalar_prefetch=0,
            grid=grid,
            in_specs=[
                pl.BlockSpec((None, None, bq, depth),
                             lambda b, h, qi, ki: (b, h, qi, 0)),
                pl.BlockSpec((None, None, bk, depth),
                             lambda b, h, qi, ki: (b, h, ki, 0)),
                pl.BlockSpec((None, None, bk, depth),
                             lambda b, h, qi, ki: (b, h, ki, 0)),
            ],
            out_specs=pl.BlockSpec((None, None, bq, depth),
                                   lambda b, h, qi, ki: (b, h, qi, 0)),
            scratch_shapes=[
                pltpu.VMEM((bq, 1), jnp.float32),       # running max m
                pltpu.VMEM((bq, 1), jnp.float32),       # running denom l
                pltpu.VMEM((bq, depth), jnp.float32),   # un-normalised acc
            ],
        ),
        compiler_params=pltpu.CompilerParams(
            dimension_semantics=("parallel", "parallel", "parallel", "arbitrary"),
            vmem_limit_bytes=vmem_limit_bytes),
    )(q, k, v)


# ---------------------------------------------------------------------------
# Parameter preprocessing (hoisted: pay once per parameter set, not per step)
# ---------------------------------------------------------------------------
def prepare_params(params, n_heads, *, compute_dtype=jnp.bfloat16):
    wq, bq_, wk, bk_, wv, bv_, wo, bo_ = params
    D = wq.shape[0]
    assert D % n_heads == 0
    depth = D // n_heads
    inv_scale = 1.0 / math.sqrt(depth)
    cdt = compute_dtype
    f32 = jnp.float32

    wq_t = (wq.T * inv_scale).astype(cdt)        # fold 1/sqrt(depth) into Q proj
    wk_t = wk.T.astype(cdt)
    wv_t = wv.T.astype(cdt)
    wo_t = wo.T.astype(cdt)
    bq_s = (bq_ * inv_scale).astype(f32).reshape(1, D)
    bk_f = bk_.astype(f32).reshape(1, D)
    bv_f = bv_.astype(f32).reshape(1, D)
    bo_f = bo_.astype(f32).reshape(1, D)

    return dict(
        n_heads=n_heads, depth=depth, d_model=D, compute_dtype=cdt,
        wq_t=wq_t, wk_t=wk_t, wv_t=wv_t, wo_t=wo_t,
        bq=bq_s, bk=bk_f, bv=bv_f, bo=bo_f,
        # fused self-attention projection: x @ [Wq|Wk|Wv]
        wqkv_t=jnp.concatenate([wq_t, wk_t, wv_t], axis=1),   # (D, 3D)
        bqkv=jnp.concatenate([bq_s, bk_f, bv_f], axis=1),     # (1, 3D)
    )


# ---------------------------------------------------------------------------
# Full MultiHeadAttention forward
# ---------------------------------------------------------------------------
def multi_head_attention(q, k, v, prep, *, block_q=128, block_kv=256,
                         block_m=256, block_n=512, block_k=512,
                         vmem_limit_bytes=None):
    B, S, D = q.shape
    H, depth, cdt = prep["n_heads"], prep["depth"], prep["compute_dtype"]
    assert D == prep["d_model"]
    M = B * S

    def lin(x2d, wt, b, out_dtype):
        return _linear(x2d, wt, b, out_dtype=out_dtype, block_m=block_m,
                       block_n=block_n, block_k=block_k,
                       vmem_limit_bytes=vmem_limit_bytes)

    if (q is k) and (k is v):
        # Self-attention: one matmul against the concatenated (D, 3D) weight;
        # activation read once, no stacked copy.
        x2d = q.reshape(M, D).astype(cdt)
        qkv = lin(x2d, prep["wqkv_t"], prep["bqkv"], cdt)          # (M, 3D)
        q2, k2, v2 = qkv[:, :D], qkv[:, D:2 * D], qkv[:, 2 * D:]
    else:
        # Cross-attention: three direct projections (no activation copies).
        q2 = lin(q.reshape(M, D).astype(cdt), prep["wq_t"], prep["bq"], cdt)
        k2 = lin(k.reshape(M, D).astype(cdt), prep["wk_t"], prep["bk"], cdt)
        v2 = lin(v.reshape(M, D).astype(cdt), prep["wv_t"], prep["bv"], cdt)

    def to_heads(x2d):                       # (M, D) -> (B, H, S, depth)
        return x2d.reshape(B, S, H, depth).transpose(0, 2, 1, 3)

    ctx = _flash_attention(to_heads(q2), to_heads(k2), to_heads(v2),
                           out_dtype=cdt, block_q=block_q, block_kv=block_kv,
                           vmem_limit_bytes=vmem_limit_bytes)      # (B,H,S,depth)

    ctx2d = ctx.transpose(0, 2, 1, 3).reshape(M, D)                # merge heads
    out = lin(ctx2d, prep["wo_t"], prep["bo"], q.dtype)            # (M, D)
    return out.reshape(B, S, D)


# ---------------------------------------------------------------------------
# Reference + test
# ---------------------------------------------------------------------------
def _xavier_uniform(key, out_f, in_f, dtype=jnp.float32):
    bound = math.sqrt(6.0 / (in_f + out_f))
    return jax.random.uniform(key, (out_f, in_f), dtype, -bound, bound)


def _reference(q, k, v, params, *, n_heads):
    """Pure-JAX reference mirroring the PyTorch forward (eval mode, no mask)."""
    B, S, D = q.shape
    depth = D // n_heads
    wq, bq_, wk, bk_, wv, bv_, wo, bo_ = params

    def split(x):
        return x.reshape(B, S, n_heads, depth).transpose(0, 2, 1, 3)

    Q = split(q @ wq.T + bq_)
    K = split(k @ wk.T + bk_)
    V = split(v @ wv.T + bv_)
    attn = jnp.einsum("bhqd,bhkd->bhqk", Q, K) / math.sqrt(depth)
    attn = jax.nn.softmax(attn, axis=-1)
    ctx = jnp.einsum("bhqk,bhkd->bhqd", attn, V)
    ctx = ctx.transpose(0, 2, 1, 3).reshape(B, S, D)
    return ctx @ wo.T + bo_


if __name__ == "__main__":
    B, S, D, H = 2, 8, 32, 4

    key = jax.random.PRNGKey(0)
    kq, kk_, kv_, kwq, kwk, kwv, kwo = jax.random.split(key, 7)

    q = jax.random.normal(kq, (B, S, D), jnp.float32)
    k = jax.random.normal(kk_, (B, S, D), jnp.float32)
    v = jax.random.normal(kv_, (B, S, D), jnp.float32)

    # deterministic parameter init (xavier_uniform weights, zero biases)
    params = (
        _xavier_uniform(kwq, D, D), jnp.zeros((D,), jnp.float32),
        _xavier_uniform(kwk, D, D), jnp.zeros((D,), jnp.float32),
        _xavier_uniform(kwv, D, D), jnp.zeros((D,), jnp.float32),
        _xavier_uniform(kwo, D, D), jnp.zeros((D,), jnp.float32),
    )

    ref = _reference(q, k, v, params, n_heads=H)

    # f32 MXU-operand path (tolerance covers TPU default matmul precision and
    # the online-softmax reassociation).
    prep_f32 = prepare_params(params, H, compute_dtype=jnp.float32)
    out_f32 = jax.block_until_ready(multi_head_attention(q, k, v, prep_f32))
    assert out_f32.shape == (B, S, D)
    assert out_f32.dtype == q.dtype
    assert jnp.allclose(out_f32, ref, atol=5e-2, rtol=5e-2), \
        "f32 mismatch vs reference"

    # Default path: bf16 MXU operands, f32 accumulation / softmax.
    prep_bf16 = prepare_params(params, H)   # compute_dtype=jnp.bfloat16
    out_bf16 = jax.block_until_ready(multi_head_attention(q, k, v, prep_bf16))
    assert out_bf16.shape == (B, S, D)
    assert jnp.allclose(out_bf16, ref, atol=1e-1, rtol=1e-1), \
        "bf16 mismatch vs reference"

    # Self-attention (q is k is v): fused x @ [Wq|Wk|Wv] projection path.
    ref_self = _reference(q, q, q, params, n_heads=H)
    out_self = jax.block_until_ready(multi_head_attention(q, q, q, prep_bf16))
    assert jnp.allclose(out_self, ref_self, atol=1e-1, rtol=1e-1), \
        "self-attention (fused QKV) mismatch vs reference"

    print("KERNEL_OK")
</pallas_src>

<mosaic_0001>
module attributes {stable_mosaic.version = 11 : i64} {
  func.func @_linear_kernel(%arg0: i32, %arg1: i32, %arg2: i32, %arg3: memref<16x32xf32, #tpu.memory_space<vmem>>, %arg4: memref<32x32xf32, #tpu.memory_space<vmem>>, %arg5: memref<1x32xf32, #tpu.memory_space<vmem>>, %arg6: memref<16x32xf32, #tpu.memory_space<vmem>>, %arg7: memref<16x32xf32, #tpu.memory_space<vmem>>) attributes {dimension_semantics = [#tpu.dimension_semantics<parallel>, #tpu.dimension_semantics<parallel>, #tpu.dimension_semantics<arbitrary>], iteration_bounds = array<i64: 1, 1, 1>, scalar_prefetch = 0 : i64, scratch_operands = 1 : i64, tpu.core_type = #tpu.core_type<tc>, window_params = [{transform_indices = @transform_0, window_bounds = array<i64: 16, 32>}, {transform_indices = @transform_1, window_bounds = array<i64: 32, 32>}, {transform_indices = @transform_2, window_bounds = array<i64: 1, 32>}, {transform_indices = @transform_3, window_bounds = array<i64: 16, 32>}]} {
    %c0_i32 = arith.constant 0 : i32
    %0 = arith.cmpi eq, %arg2, %c0_i32 : i32
    %1 = arith.extui %0 : i1 to i32
    %c0_i32_0 = arith.constant 0 : i32
    %2 = arith.cmpi ne, %1, %c0_i32_0 : i32
    scf.if %2 {
      %cst_10 = arith.constant 0.000000e+00 : f32
      %12 = vector.broadcast %cst_10 : f32 to vector<16x32xf32>
      %c0_11 = arith.constant 0 : index
      %c0_12 = arith.constant 0 : index
      %13 = vector.load %arg7[%c0_11, %c0_12] : memref<16x32xf32, #tpu.memory_space<vmem>>, vector<16x32xf32>
      tpu.vector_store %arg7[%c0_11, %c0_12], %12 {strides = array<i32>} : memref<16x32xf32, #tpu.memory_space<vmem>>, vector<16x32xf32>,
    } else {
    }
    %c0 = arith.constant 0 : index
    %c0_1 = arith.constant 0 : index
    %3 = vector.load %arg7[%c0, %c0_1] : memref<16x32xf32, #tpu.memory_space<vmem>>, vector<16x32xf32>
    %c0_2 = arith.constant 0 : index
    %c0_3 = arith.constant 0 : index
    %4 = vector.load %arg3[%c0_2, %c0_3] : memref<16x32xf32, #tpu.memory_space<vmem>>, vector<16x32xf32>
    %c0_4 = arith.constant 0 : index
    %c0_5 = arith.constant 0 : index
    %5 = vector.load %arg4[%c0_4, %c0_5] : memref<32x32xf32, #tpu.memory_space<vmem>>, vector<32x32xf32>
    %cst = arith.constant dense<0.000000e+00> : vector<16x32xf32>
    %6 = tpu.matmul %4, %5, %cst {dimension_numbers = #tpu.dot_dimension_numbers<[1], [0], [0], [1], [0, 0, 1, 1], [], []>} : vector<16x32xf32>, vector<32x32xf32>, vector<16x32xf32> -> vector<16x32xf32>
    %7 = arith.addf %3, %6 : vector<16x32xf32>
    %c0_6 = arith.constant 0 : index
    %c0_7 = arith.constant 0 : index
    %8 = vector.load %arg7[%c0_6, %c0_7] : memref<16x32xf32, #tpu.memory_space<vmem>>, vector<16x32xf32>
    tpu.vector_store %arg7[%c0_6, %c0_7], %7 {strides = array<i32>} : memref<16x32xf32, #tpu.memory_space<vmem>>, vector<16x32xf32>,
    %c0_i32_8 = arith.constant 0 : i32
    %9 = arith.cmpi eq, %arg2, %c0_i32_8 : i32
    %10 = arith.extui %9 : i1 to i32
    %c0_i32_9 = arith.constant 0 : i32
    %11 = arith.cmpi ne, %10, %c0_i32_9 : i32
    scf.if %11 {
      %c0_10 = arith.constant 0 : index
      %c0_11 = arith.constant 0 : index
      %12 = vector.load %arg7[%c0_10, %c0_11] : memref<16x32xf32, #tpu.memory_space<vmem>>, vector<16x32xf32>
      %c0_12 = arith.constant 0 : index
      %c0_13 = arith.constant 0 : index
      %13 = vector.load %arg5[%c0_12, %c0_13] : memref<1x32xf32, #tpu.memory_space<vmem>>, vector<1x32xf32>
      %14 = vector.broadcast %13 : vector<1x32xf32> to vector<16x32xf32>
      %15 = arith.addf %12, %14 : vector<16x32xf32>
      %c0_14 = arith.constant 0 : index
      %c0_15 = arith.constant 0 : index
      %16 = vector.load %arg6[%c0_14, %c0_15] : memref<16x32xf32, #tpu.memory_space<vmem>>, vector<16x32xf32>
      tpu.vector_store %arg6[%c0_14, %c0_15], %15 {strides = array<i32>} : memref<16x32xf32, #tpu.memory_space<vmem>>, vector<16x32xf32>,
    } else {
    }
    return
  }
  func.func @transform_0(%arg0: i32, %arg1: i32, %arg2: i32) -> (i32, i32) {
    %c0_i32 = arith.constant 0 : i32
    return %arg0, %arg2 : i32, i32
  }
  func.func @transform_1(%arg0: i32, %arg1: i32, %arg2: i32) -> (i32, i32) {
    %c0_i32 = arith.constant 0 : i32
    return %arg2, %arg1 : i32, i32
  }
  func.func @transform_2(%arg0: i32, %arg1: i32, %arg2: i32) -> (i32, i32) {
    %c0_i32 = arith.constant 0 : i32
    %c0_i32_0 = arith.constant 0 : i32
    return %c0_i32, %arg1 : i32, i32
  }
  func.func @transform_3(%arg0: i32, %arg1: i32, %arg2: i32) -> (i32, i32) {
    %c0_i32 = arith.constant 0 : i32
    return %arg0, %arg1 : i32, i32
  }
}

</mosaic_0001>

<llo_original>
// kernel: tpu_custom_call.1
$region0: #{tpu_custom_call.1}
  #allocation0 [shape = 'u32[]', space=smem, size = 0x4, offset = 0x4, fixed_abs, tag = 'smem constant byte address 0x4 - core index']
  #allocation1 [shape = 'u32[144,128]{1,0:T(1,128)}', space=vmem, size = 0x12000, scoped, tag = 'internal scratch']
  #allocation2 [shape = 'f32[16,32]{1,0:T(8,128)}', space=vmem, size = 0x2000, scoped, tag = 'scratch operand']
  %s0 = inlined_call_operand.hbm [shape: f32[16,32], index: 0, kind: input, shape index: {}]
  %s1 = inlined_call_operand.hbm [shape: f32[32,32], index: 1, kind: input, shape index: {}]
  %s2 = inlined_call_operand.vmem [shape: f32[1,32], index: 2, kind: input, shape index: {}]
  %s3 = inlined_call_operand.hbm [shape: f32[16,32], index: 3, kind: output, shape index: {}]
  %s4 = sld [smem:[#allocation0]]
  $region38: #{tpu_custom_call.1} parent=0
    _
  %s6 = ssub.s32 1, %s4
  %s7 = scalar_select 0, %s6, %s4
  $region1: #{tpu_custom_call.1} parent=0
    #allocation3 [shape = 'u8[8192]{0}', space=vmem, size = 0x2000, scoped, tag = 'input window, operand 0, single buffered']
    #allocation4 [shape = 's32[1]{0}', space=sflag, size = 0x4, scoped, tag = 'scoped memory for tpu_custom_call.1']
    #allocation5 [shape = 's32[1]{0}', space=sflag, size = 0x4, scoped, tag = 'scoped memory for tpu_custom_call.1']
    #allocation6 [shape = 'u8[16384]{0}', space=vmem, size = 0x4000, scoped, tag = 'input window, operand 1, single buffered']
    #allocation7 [shape = 's32[1]{0}', space=sflag, size = 0x4, scoped, tag = 'scoped memory for tpu_custom_call.1']
    #allocation8 [shape = 'u8[8192]{0}', space=vmem, size = 0x2000, scoped, tag = 'output window, operand 0, single buffered']
    %8 = vsyncpa [#allocation4], 0
    %9 = vsyncpa [#allocation7], 0
    %10 = vsyncpa [#allocation5], 0
    // Predicated region
    $region2: #{tpu_custom_call.1} parent=1 // pred_check
      _
    $region3: #{tpu_custom_call.1} parent=1 // pred_check_branch
      %12 = sbr.rel (0) target = $region5
    $region4: #{tpu_custom_call.1} parent=1 // pred_region
      %s14 = ssub.s32 256, 256
      %15 = vsyncadd [#allocation4], %s14
      %s16 = sshll.u32 [#allocation3], 4
      %s17 = int_to_ptr.vmem [resolvable:$true] %s16
      %22 = dma.hbm_to_vmem [thread:$0]  %s0, 256, %s17, [#allocation4], 128, 128, 8
    $region5: #{tpu_custom_call.1} parent=1 // pred_fallthru
      _
    // Predicated region
    $region6: #{tpu_custom_call.1} parent=1 // pred_check
      _
    $region7: #{tpu_custom_call.1} parent=1 // pred_check_branch
      %24 = sbr.rel (0) target = $region9
    $region8: #{tpu_custom_call.1} parent=1 // pred_region
      %s26 = ssub.s32 512, 512
      %27 = vsyncadd [#allocation7], %s26
      %s28 = sshll.u32 [#allocation6], 4
      %s29 = int_to_ptr.vmem [resolvable:$true] %s28
      %34 = dma.hbm_to_vmem [thread:$0]  %s1, 512, %s29, [#allocation7], 128, 128, 8
    $region9: #{tpu_custom_call.1} parent=1 // pred_fallthru
      _
    // Predicated region
    $region10: #{tpu_custom_call.1} parent=1 // pred_check
      _
    $region11: #{tpu_custom_call.1} parent=1 // pred_check_branch
      %36 = sbr.rel (0) target = $region13
    $region12: #{tpu_custom_call.1} parent=1 // pred_region
      _
    $region13: #{tpu_custom_call.1} parent=1 // pred_fallthru
      _
    // Predicated region
    $region14: #{tpu_custom_call.1} parent=1 // pred_check
      _
    $region15: #{tpu_custom_call.1} parent=1 // pred_check_branch
      %38 = sbr.rel (0) target = $region17
    $region16: #{tpu_custom_call.1} parent=1 // pred_region
      %39 = dma.done [#allocation4], 256
    $region17: #{tpu_custom_call.1} parent=1 // pred_fallthru
      _
    // Predicated region
    $region18: #{tpu_custom_call.1} parent=1 // pred_check
      _
    $region19: #{tpu_custom_call.1} parent=1 // pred_check_branch
      %41 = sbr.rel (0) target = $region21
    $region20: #{tpu_custom_call.1} parent=1 // pred_region
      %42 = dma.done [#allocation7], 512
    $region21: #{tpu_custom_call.1} parent=1 // pred_fallthru
      _
    %p43 = scmp.eq.s32.totalorder 0, 0
    // Predicated region
    $region22: #{tpu_custom_call.1} parent=1 // pred_check
      %p44 = pneg %p43
    $region23: #{tpu_custom_call.1} parent=1 // pred_check_branch
      %46 = sbr.rel (%p44) target = $region25
    $region24: #{tpu_custom_call.1} parent=1 // pred_region
      %vm47 = vcmask 261120
      %48 = vst.msk [vmem:[#allocation2] sm:$0xff] %vm47, 0.0
      %49 = vst.msk [vmem:[#allocation2 + $0x8] sm:$0xff] %vm47, 0.0
    $region25: #{tpu_custom_call.1} parent=1 // pred_fallthru
      _
    %v50 = vld [vmem:[#allocation2] sm:$0xff]
    %v51 = vld [vmem:[#allocation2 + $0x8] sm:$0xff]
    %v52 = vld [vmem:[#allocation3] sm:$0xff]
    %v53 = vld [vmem:[#allocation3 + $0x8] sm:$0xff]
    %v54 = vld [vmem:[#allocation6] sm:$0xff]
    %v55 = vld [vmem:[#allocation6 + $0x8] sm:$0xff]
    %v56 = vld [vmem:[#allocation6 + $0x10] sm:$0xff]
    %v57 = vld [vmem:[#allocation6 + $0x18] sm:$0xff]
    %vm58 = vcmask 261120
    %v60 = vsel %vm58, %v52, 0
    %v63 = vsel %vm58, %v53, 0
    %65 = vmatprep.subr.mxu0 0.0
    %66 = vmatpush1.msra.mxu0 %v54
    %67 = vmatprep.subr.mxu0 0.0
    %68 = vmatpush1.msra.mxu0 %v55
    %69 = vmatprep.subr.mxu0 0.0
    %70 = vmatpush1.msra.mxu0 %v56
    %71 = vmatprep.subr.mxu0 0.0
    %72 = vmatpush1.msra.mxu0 %v57
    %73 = vmatprep.subr.mxu0 0.0
    %74 = vmatpush1.msra.mxu0 0.0
    %75 = vmatprep.subr.mxu0 0.0
    %76 = vmatpush1.msra.mxu0 0.0
    %77 = vmatprep.subr.mxu0 0.0
    %78 = vmatpush1.msra.mxu0 0.0
    %79 = vmatprep.subr.mxu0 0.0
    %80 = vmatpush1.msra.mxu0 0.0
    %81 = vmatprep.subr.mxu0 0.0
    %82 = vmatpush1.msra.mxu0 0.0
    %83 = vmatprep.subr.mxu0 0.0
    %84 = vmatpush1.msra.mxu0 0.0
    %85 = vmatprep.subr.mxu0 0.0
    %86 = vmatpush1.msra.mxu0 0.0
    %87 = vmatprep.subr.mxu0 0.0
    %88 = vmatpush1.msra.mxu0 0.0
    %89 = vmatprep.subr.mxu0 0.0
    %90 = vmatpush1.msra.mxu0 0.0
    %91 = vmatprep.subr.mxu0 0.0
    %92 = vmatpush1.msra.mxu0 0.0
    %93 = vmatprep.subr.mxu0 0.0
    %94 = vmatpush1.msra.mxu0 0.0
    %95 = vmatprep.subr.mxu0 0.0
    %96 = vmatpush1.msra.mxu0 0.0
    %97 = vmatprep.subr.mxu0 0.0
    %98 = vmatpush1.msra.mxu0 0.0
    %99 = vmatprep.subr.mxu0 0.0
    %100 = vmatpush1.msra.mxu0 0.0
    %101 = vmatprep.subr.mxu0 0.0
    %102 = vmatpush1.msra.mxu0 0.0
    %103 = vmatprep.subr.mxu0 0.0
    %104 = vmatpush1.msra.mxu0 0.0
    %105 = vmatprep.subr.mxu0 0.0
    %106 = vmatpush1.msra.mxu0 0.0
    %107 = vmatprep.subr.mxu0 0.0
    %108 = vmatpush1.msra.mxu0 0.0
    %109 = vmatprep.subr.mxu0 0.0
    %110 = vmatpush1.msra.mxu0 0.0
    %111 = vmatprep.subr.mxu0 0.0
    %112 = vmatpush1.msra.mxu0 0.0
    %113 = vmatprep.subr.mxu0 0.0
    %114 = vmatpush1.msra.mxu0 0.0
    %115 = vmatprep.subr.mxu0 0.0
    %116 = vmatpush1.msra.mxu0 0.0
    %117 = vmatprep.subr.mxu0 0.0
    %118 = vmatpush1.msra.mxu0 0.0
    %119 = vmatprep.subr.mxu0 0.0
    %120 = vmatpush1.msra.mxu0 0.0
    %121 = vmatprep.subr.mxu0 0.0
    %122 = vmatpush1.msra.mxu0 0.0
    %123 = vmatprep.subr.mxu0 0.0
    %124 = vmatpush1.msra.mxu0 0.0
    %125 = vmatprep.subr.mxu0 0.0
    %126 = vmatpush1.msra.mxu0 0.0
    %127 = vmatprep.subr.mxu0 0.0
    %128 = vmatpush1.msra.mxu0 0.0
    %129 = vmatprep.mubr.f32.mxu0 0.0
    %130 = vmatmul.mubr.f32.gmra.mrb[0].mxu0 %v60
    %v131 = vpop.f32.mrb[0].mxu0
    %v132 = vadd.f32 0.0, %v131
    %v133 = vpop.f32.mrb[0].mxu0
    %134 = vmatprep.mubr.f32.mxu0 0.0
    %135 = vmatmul.mubr.f32.gmra.mrb[0].mxu0 %v63
    %v136 = vpop.f32.mrb[0].mxu0
    %v137 = vadd.f32 0.0, %v136
    %v138 = vpop.f32.mrb[0].mxu0
    %139 = vdwg.mxu0
    %v140 = vadd.f32 %v50, %v132
    %v141 = vadd.f32 %v51, %v137
    %142 = vst.msk [vmem:[#allocation2] sm:$0xff] %vm58, %v140
    %143 = vst.msk [vmem:[#allocation2 + $0x8] sm:$0xff] %vm58, %v141
    // Predicated region
    $region26: #{tpu_custom_call.1} parent=1 // pred_check
      %p144 = pneg %p43
    $region27: #{tpu_custom_call.1} parent=1 // pred_check_branch
      %146 = sbr.rel (%p144) target = $region29
    $region28: #{tpu_custom_call.1} parent=1 // pred_region
      %v147 = vld [vmem:[#allocation2] sm:$0xff]
      %v148 = vld [vmem:[#allocation2 + $0x8] sm:$0xff]
      %v149 = vld [vmem:[%s2] sm:$0x1]
      %v151 = vlaneseq
      %v152 = vshrl.u32 %v151, 7
      %v153 = vsub.s32 0, %v152
      %v154 = vrot.slane %v149, %v153
      %v156 = vadd.f32 %v147, %v154
      %v157 = vadd.f32 %v148, %v154
      %158 = vst.msk [vmem:[#allocation8] sm:$0xff] %vm58, %v156
      %159 = vst.msk [vmem:[#allocation8 + $0x8] sm:$0xff] %vm58, %v157
    $region29: #{tpu_custom_call.1} parent=1 // pred_fallthru
      _
    // Predicated region
    $region30: #{tpu_custom_call.1} parent=1 // pred_check
      _
    $region31: #{tpu_custom_call.1} parent=1 // pred_check_branch
      %161 = sbr.rel (0) target = $region33
    $region32: #{tpu_custom_call.1} parent=1 // pred_region
      %s163 = ssub.s32 256, 256
      %164 = vsyncadd [#allocation5], %s163
      %s165 = sshll.u32 [#allocation8], 4
      %s166 = int_to_ptr.vmem [resolvable:$true] %s165
      %171 = dma.vmem_to_hbm [thread:$0]  %s166, 256, %s3, [#allocation5], 128, 128, 8
    $region33: #{tpu_custom_call.1} parent=1 // pred_fallthru
      _
    // Predicated region
    $region34: #{tpu_custom_call.1} parent=1 // pred_check
      _
    $region35: #{tpu_custom_call.1} parent=1 // pred_check_branch
      %173 = sbr.rel (0) target = $region37
    $region36: #{tpu_custom_call.1} parent=1 // pred_region
      %174 = dma.done [#allocation5], 256
    $region37: #{tpu_custom_call.1} parent=1 // pred_fallthru
      _
    %175 = vsyncpa [#allocation4], 1
    %176 = vsyncpa [#allocation7], 1
    %177 = vsyncpa [#allocation5], 1

</llo_original>
